<compile_context>
chip_gen: v5e
topology: v5e:2x2
jax: 0.10.0
libtpu: 0.0.40
codegen_flags: <defaults>
</compile_context>

<pallas_src>
import functools
from typing import List

import jax
import jax.numpy as jnp
from jax.experimental import pallas as pl
from jax.experimental.pallas import tpu as pltpu

KS = 3        # conv kernel size
STRIDE = 2
PAD = 1


# ----------------------------------------------------------------------------
# Fused kernel: both conv stages + bias + ReLU for ONE batch element.
# ----------------------------------------------------------------------------
def _fused_backbone_kernel(x_ref, w1_ref, b1_ref, w2_ref, b2_ref,
                           f1_ref, f2_ref, *, cin, c1, c2):
    """Layouts (R = H//4, S = W//4):

    x_ref : (1, 4, 4, R+1, (S+1)*cin) f32  space-to-depth-4 planes of the
            zero-padded NHWC input:  x_ref[0, a, b, r, s*cin + c]
              == x_pad[4r + a, 4s + b, c]
    w1_ref: (9*S*cin, S*c1) bf16   block-diagonal im2col weights (stage 1)
    b1_ref: (1, S*c1)       f32
    w2_ref: (9*S*c1, S*c2)  bf16   block-diagonal im2col weights (stage 2)
    b2_ref: (1, S*c2)       f32
    f1_ref: (1, 2, 2, R, S*c1) f32 stage-1 feature in output-parity planes:
            f1_ref[0, p, q, r, s*c1 + o] == relu(conv1(x))[2r+p, 2s+q, o]
    f2_ref: (1, R, S*c2)    f32    f2_ref[0, y, x*c2 + f] == stage-2 out[y,x,f]
    """
    R = f1_ref.shape[3]
    S = f1_ref.shape[4] // c1

    w1 = w1_ref[...]
    w2 = w2_ref[...]
    b1 = b1_ref[...]
    b2 = b2_ref[...]

    # ---- stage 1: one matmul per output-parity plane -----------------------
    # out1[2r+p, 2s+q] needs x_pad[4r + (2p+i), 4s + (2q+j)]; with the
    # space-to-depth-4 planes every tap is a static unstrided slice.
    h = [[None, None], [None, None]]
    for p in range(2):
        for q in range(2):
            cols = []
            for i in range(KS):
                u = 2 * p + i
                a, r0 = u % 4, u // 4
                for j in range(KS):
                    v = 2 * q + j
                    b_, s0 = v % 4, v // 4
                    cols.append(
                        x_ref[0, a, b_, r0:r0 + R, s0 * cin:(s0 + S) * cin])
            patches = jnp.concatenate(cols, axis=-1)          # (R, 9*S*cin) f32
            patches = patches.astype(jnp.bfloat16)
            acc = jnp.dot(patches, w1, preferred_element_type=jnp.float32)
            acc = jnp.maximum(acc + b1, 0.0)                   # (R, S*c1) f32
            f1_ref[0, p, q] = acc
            h[p][q] = acc.astype(jnp.bfloat16)

    # ---- stage 2: shifted parity planes of the (VMEM-resident) stage-1 out --
    # out2[y, x] needs out1_pad[2y+i, 2x+j]; in parity-plane form every tap is
    # the full plane, optionally shifted by one row/column block with zero fill.
    zrow = jnp.zeros((1, S * c1), jnp.bfloat16)
    zcol = jnp.zeros((R, c1), jnp.bfloat16)
    cols2 = []
    for i in range(KS):
        for j in range(KS):
            plane = h[(i + 1) % 2][(j + 1) % 2]                # (R, S*c1) bf16
            if i == 0:   # top zero-pad row of the stage-1 output
                plane = jnp.concatenate([zrow, plane[:R - 1, :]], axis=0)
            if j == 0:   # left zero-pad column of the stage-1 output
                plane = jnp.concatenate([zcol, plane[:, :(S - 1) * c1]], axis=1)
            cols2.append(plane)
    patches2 = jnp.concatenate(cols2, axis=-1)                 # (R, 9*S*c1) bf16
    acc2 = jnp.dot(patches2, w2, preferred_element_type=jnp.float32)
    f2_ref[0] = jnp.maximum(acc2 + b2, 0.0)                    # (R, S*c2) f32


# ----------------------------------------------------------------------------
# Wrapper-side layout helpers (pure layout ops, run under jit / at init).
# ----------------------------------------------------------------------------
def _prep_input(x_nchw, cin):
    """NCHW -> padded NHWC -> space-to-depth-by-4 phase planes (no amplification)."""
    B, _, H, W = x_nchw.shape
    x = jnp.transpose(x_nchw, (0, 2, 3, 1))                    # (B, H, W, cin)
    # conv padding (1) plus alignment padding to a multiple of 4 (zeros, never read)
    xp = jnp.pad(x, ((0, 0), (PAD, PAD + 2), (PAD, PAD + 2), (0, 0)))
    Hp, Wp = H + 4, W + 4
    xs = xp.reshape(B, Hp // 4, 4, Wp // 4, 4, cin)
    xs = xs.transpose(0, 2, 4, 1, 3, 5)                        # (B,4,4,R+1,S+1,cin)
    return xs.reshape(B, 4, 4, Hp // 4, (Wp // 4) * cin)


def _prep_weights(params, cin, c1, c2, s1):
    """Pack OIHW weights into the block-diagonal im2col matrices used in-kernel."""
    (w1, b1), (w2, b2) = params
    eye = jnp.eye(s1, dtype=jnp.float32)

    w1_tap = jnp.transpose(w1, (2, 3, 1, 0)).reshape(KS * KS, cin, c1)
    wb1 = jnp.einsum('tcf,us->tucsf', w1_tap, eye)
    wb1 = wb1.reshape(KS * KS * s1 * cin, s1 * c1).astype(jnp.bfloat16)
    bb1 = jnp.tile(b1, s1).reshape(1, s1 * c1).astype(jnp.float32)

    w2_tap = jnp.transpose(w2, (2, 3, 1, 0)).reshape(KS * KS, c1, c2)
    wb2 = jnp.einsum('tcf,us->tucsf', w2_tap, eye)
    wb2 = wb2.reshape(KS * KS * s1 * c1, s1 * c2).astype(jnp.bfloat16)
    bb2 = jnp.tile(b2, s1).reshape(1, s1 * c2).astype(jnp.float32)
    return wb1, bb1, wb2, bb2


def _fused_forward(x_nchw, wb1, bb1, wb2, bb2, *, cin, c1, c2):
    B, _, H, W = x_nchw.shape
    R, S = H // 4, W // 4
    xs2d = _prep_input(x_nchw, cin)

    kernel = functools.partial(_fused_backbone_kernel, cin=cin, c1=c1, c2=c2)
    # Unpadded (true conv) flops / bytes for the scheduler hint.
    flops = 2 * B * ((2 * R) * (2 * S) * KS * KS * cin * c1
                     + R * S * KS * KS * c1 * c2)
    bytes_accessed = (xs2d.size * 4 + wb1.size * 2 + wb2.size * 2
                      + (bb1.size + bb2.size) * 4
                      + B * (2 * 2 * R * S * c1 + R * S * c2) * 4)

    f1_raw, f2_raw = pl.pallas_call(
        kernel,
        out_shape=(
            jax.ShapeDtypeStruct((B, 2, 2, R, S * c1), jnp.float32),
            jax.ShapeDtypeStruct((B, R, S * c2), jnp.float32),
        ),
        grid_spec=pltpu.PrefetchScalarGridSpec(
            num_scalar_prefetch=0,
            grid=(B,),                                  # >= 2 parallel steps
            in_specs=[
                pl.BlockSpec((1, 4, 4, R + 1, (S + 1) * cin),
                             lambda n: (n, 0, 0, 0, 0)),
                # weights / biases stay resident across grid steps (tiny here;
                # pl.Buffered(1) would halve their buffering for big layers).
                pl.BlockSpec(wb1.shape, lambda n: (0, 0)),
                pl.BlockSpec(bb1.shape, lambda n: (0, 0)),
                pl.BlockSpec(wb2.shape, lambda n: (0, 0)),
                pl.BlockSpec(bb2.shape, lambda n: (0, 0)),
            ],
            out_specs=[
                pl.BlockSpec((1, 2, 2, R, S * c1), lambda n: (n, 0, 0, 0, 0)),
                pl.BlockSpec((1, R, S * c2), lambda n: (n, 0, 0)),
            ],
        ),
        compiler_params=pltpu.CompilerParams(
            dimension_semantics=("parallel",),
        ),
        cost_estimate=pl.CostEstimate(
            flops=flops, transcendentals=0, bytes_accessed=bytes_accessed),
    )(xs2d, wb1, bb1, wb2, bb2)

    # Un-shuffle parity planes back to NCHW (pure layout, outside the kernel;
    # the stage-1 reassembly is DCE'd when only the final feature is used).
    f1 = f1_raw.reshape(B, 2, 2, R, S, c1).transpose(0, 3, 1, 4, 2, 5)
    f1 = f1.reshape(B, 2 * R, 2 * S, c1).transpose(0, 3, 1, 2)   # (B, c1, H/2, W/2)
    f2 = f2_raw.reshape(B, R, S, c2).transpose(0, 3, 1, 2)       # (B, c2, H/4, W/4)
    return f1, f2


# ----------------------------------------------------------------------------
# The backbone (mirrors VisionBackboneBase semantics)
# ----------------------------------------------------------------------------
class VisionBackbonePallas:
    """Minimal concrete VisionBackboneBase: forward(x) = forward_features(x)[-1]."""

    def __init__(self, c_in: int = 4, stage_ch=(8, 16), seed: int = 0):
        assert len(stage_ch) == 2, "fused kernel implements the 2-stage stack"
        self._features_ch: List[int] = list(stage_ch)
        self.c_in = c_in
        self.k, self.stride, self.pad = KS, STRIDE, PAD

        # Raw f32 parameters (reference / "state_dict" analogue).
        key = jax.random.PRNGKey(seed)
        self.params = []
        prev = c_in
        for c_out in stage_ch:
            key, kw_key, kb_key = jax.random.split(key, 3)
            fan_in = prev * KS * KS
            w = jax.random.normal(kw_key, (c_out, prev, KS, KS), jnp.float32)
            w = w * (1.0 / jnp.sqrt(jnp.float32(fan_in)))
            b = 0.01 * jax.random.normal(kb_key, (c_out,), jnp.float32)
            self.params.append((w, b))
            prev = c_out

        # Kernel-ready packed weights are built once and cached (keyed by W//4,
        # the only spatial dependence of the packing); forward is jitted.
        self._packed_cache = {}
        c1, c2 = stage_ch
        self._jit_forward = jax.jit(functools.partial(
            _fused_forward, cin=c_in, c1=c1, c2=c2))

    @property
    def features_ch(self) -> List[int]:
        return self._features_ch

    def _packed(self, s1: int):
        if s1 not in self._packed_cache:
            c1, c2 = self._features_ch
            self._packed_cache[s1] = _prep_weights(
                self.params, self.c_in, c1, c2, s1)
        return self._packed_cache[s1]

    def forward_features(self, x: jnp.ndarray) -> List[jnp.ndarray]:
        B, C, H, W = x.shape
        assert C == self.c_in and H % 4 == 0 and W % 4 == 0
        wb1, bb1, wb2, bb2 = self._packed(W // 4)
        f1, f2 = self._jit_forward(x, wb1, bb1, wb2, bb2)
        return [f1, f2]

    def forward(self, x: jnp.ndarray) -> jnp.ndarray:
        features = self.forward_features(x)
        return features[-1]

    __call__ = forward


# ----------------------------------------------------------------------------
def _reference_forward(x, params, stride, pad):
    """Pure-JAX f32 reference (lax.conv) of the same 2-stage stack."""
    feats = []
    cur = x
    for (w, b) in params:
        cur = jax.lax.conv_general_dilated(
            cur, w, window_strides=(stride, stride),
            padding=((pad, pad), (pad, pad)),
            dimension_numbers=("NCHW", "OIHW", "NCHW"))
        cur = jnp.maximum(cur + b.reshape(1, -1, 1, 1), 0.0)
        feats.append(cur)
    return feats


if __name__ == "__main__":
    key = jax.random.PRNGKey(0)
    x = jax.random.normal(key, (2, 4, 16, 16), jnp.float32)   # NCHW

    model = VisionBackbonePallas(c_in=4, stage_ch=(8, 16), seed=0)
    feats = model.forward_features(x)
    y = jax.block_until_ready(model(x))

    assert y.shape == (2, 16, 4, 4), y.shape
    assert y.dtype == jnp.float32
    assert feats[0].shape == (2, 8, 8, 8), feats[0].shape
    assert model.features_ch == [8, 16]

    # sanity check vs. f32 lax.conv reference (loose tol: MXU operands are bf16)
    ref_feats = _reference_forward(x, model.params, STRIDE, PAD)
    err1 = float(jnp.max(jnp.abs(feats[0] - ref_feats[0])))
    err2 = float(jnp.max(jnp.abs(y - ref_feats[1])))
    assert err1 < 0.1, f"stage-1 max abs err vs reference: {err1}"
    assert err2 < 0.1, f"stage-2 max abs err vs reference: {err2}"

    print("KERNEL_OK")
</pallas_src>

<mosaic_0001>
module attributes {stable_mosaic.version = 11 : i64} {
  func.func @_fused_backbone_kernel(%arg0: i32, %arg1: memref<1x4x4x5x20xf32, #tpu.memory_space<vmem>>, %arg2: memref<144x32xbf16, #tpu.memory_space<vmem>>, %arg3: memref<1x32xf32, #tpu.memory_space<vmem>>, %arg4: memref<288x64xbf16, #tpu.memory_space<vmem>>, %arg5: memref<1x64xf32, #tpu.memory_space<vmem>>, %arg6: memref<1x2x2x4x32xf32, #tpu.memory_space<vmem>>, %arg7: memref<1x4x64xf32, #tpu.memory_space<vmem>>) attributes {dimension_semantics = [#tpu.dimension_semantics<parallel>], iteration_bounds = array<i64: 2>, scalar_prefetch = 0 : i64, scratch_operands = 0 : i64, tpu.core_type = #tpu.core_type<tc>, window_params = [{transform_indices = @transform_0, window_bounds = array<i64: 1, 4, 4, 5, 20>}, {pipeline_mode = #tpu.pipeline_mode<synchronous>, transform_indices = @transform_1, window_bounds = array<i64: 144, 32>}, {pipeline_mode = #tpu.pipeline_mode<synchronous>, transform_indices = @transform_2, window_bounds = array<i64: 1, 32>}, {pipeline_mode = #tpu.pipeline_mode<synchronous>, transform_indices = @transform_3, window_bounds = array<i64: 288, 64>}, {pipeline_mode = #tpu.pipeline_mode<synchronous>, transform_indices = @transform_4, window_bounds = array<i64: 1, 64>}, {transform_indices = @transform_5, window_bounds = array<i64: 1, 2, 2, 4, 32>}, {transform_indices = @transform_6, window_bounds = array<i64: 1, 4, 64>}]} {
    %c0 = arith.constant 0 : index
    %c0_0 = arith.constant 0 : index
    %0 = vector.load %arg2[%c0, %c0_0] : memref<144x32xbf16, #tpu.memory_space<vmem>>, vector<144x32xbf16>
    %c0_1 = arith.constant 0 : index
    %c0_2 = arith.constant 0 : index
    %1 = vector.load %arg4[%c0_1, %c0_2] : memref<288x64xbf16, #tpu.memory_space<vmem>>, vector<288x64xbf16>
    %c0_3 = arith.constant 0 : index
    %c0_4 = arith.constant 0 : index
    %2 = vector.load %arg3[%c0_3, %c0_4] : memref<1x32xf32, #tpu.memory_space<vmem>>, vector<1x32xf32>
    %c0_5 = arith.constant 0 : index
    %c0_6 = arith.constant 0 : index
    %3 = vector.load %arg5[%c0_5, %c0_6] : memref<1x64xf32, #tpu.memory_space<vmem>>, vector<1x64xf32>
    %c0_7 = arith.constant 0 : index
    %c0_8 = arith.constant 0 : index
    %c0_9 = arith.constant 0 : index
    %c0_10 = arith.constant 0 : index
    %c0_11 = arith.constant 0 : index
    %4 = vector.load %arg1[%c0_7, %c0_8, %c0_9, %c0_10, %c0_11] : memref<1x4x4x5x20xf32, #tpu.memory_space<vmem>>, vector<1x1x1x4x16xf32>
    %5 = vector.shape_cast %4 : vector<1x1x1x4x16xf32> to vector<4x16xf32>
    %c0_12 = arith.constant 0 : index
    %c0_13 = arith.constant 0 : index
    %c1 = arith.constant 1 : index
    %c0_14 = arith.constant 0 : index
    %c0_15 = arith.constant 0 : index
    %6 = vector.load %arg1[%c0_12, %c0_13, %c1, %c0_14, %c0_15] : memref<1x4x4x5x20xf32, #tpu.memory_space<vmem>>, vector<1x1x1x4x16xf32>
    %7 = vector.shape_cast %6 : vector<1x1x1x4x16xf32> to vector<4x16xf32>
    %c0_16 = arith.constant 0 : index
    %c0_17 = arith.constant 0 : index
    %c2 = arith.constant 2 : index
    %c0_18 = arith.constant 0 : index
    %c0_19 = arith.constant 0 : index
    %8 = vector.load %arg1[%c0_16, %c0_17, %c2, %c0_18, %c0_19] : memref<1x4x4x5x20xf32, #tpu.memory_space<vmem>>, vector<1x1x1x4x16xf32>
    %9 = vector.shape_cast %8 : vector<1x1x1x4x16xf32> to vector<4x16xf32>
    %c0_20 = arith.constant 0 : index
    %c1_21 = arith.constant 1 : index
    %c0_22 = arith.constant 0 : index
    %c0_23 = arith.constant 0 : index
    %c0_24 = arith.constant 0 : index
    %10 = vector.load %arg1[%c0_20, %c1_21, %c0_22, %c0_23, %c0_24] : memref<1x4x4x5x20xf32, #tpu.memory_space<vmem>>, vector<1x1x1x4x16xf32>
    %11 = vector.shape_cast %10 : vector<1x1x1x4x16xf32> to vector<4x16xf32>
    %c0_25 = arith.constant 0 : index
    %c1_26 = arith.constant 1 : index
    %c1_27 = arith.constant 1 : index
    %c0_28 = arith.constant 0 : index
    %c0_29 = arith.constant 0 : index
    %12 = vector.load %arg1[%c0_25, %c1_26, %c1_27, %c0_28, %c0_29] : memref<1x4x4x5x20xf32, #tpu.memory_space<vmem>>, vector<1x1x1x4x16xf32>
    %13 = vector.shape_cast %12 : vector<1x1x1x4x16xf32> to vector<4x16xf32>
    %c0_30 = arith.constant 0 : index
    %c1_31 = arith.constant 1 : index
    %c2_32 = arith.constant 2 : index
    %c0_33 = arith.constant 0 : index
    %c0_34 = arith.constant 0 : index
    %14 = vector.load %arg1[%c0_30, %c1_31, %c2_32, %c0_33, %c0_34] : memref<1x4x4x5x20xf32, #tpu.memory_space<vmem>>, vector<1x1x1x4x16xf32>
    %15 = vector.shape_cast %14 : vector<1x1x1x4x16xf32> to vector<4x16xf32>
    %c0_35 = arith.constant 0 : index
    %c2_36 = arith.constant 2 : index
    %c0_37 = arith.constant 0 : index
    %c0_38 = arith.constant 0 : index
    %c0_39 = arith.constant 0 : index
    %16 = vector.load %arg1[%c0_35, %c2_36, %c0_37, %c0_38, %c0_39] : memref<1x4x4x5x20xf32, #tpu.memory_space<vmem>>, vector<1x1x1x4x16xf32>
    %17 = vector.shape_cast %16 : vector<1x1x1x4x16xf32> to vector<4x16xf32>
    %c0_40 = arith.constant 0 : index
    %c2_41 = arith.constant 2 : index
    %c1_42 = arith.constant 1 : index
    %c0_43 = arith.constant 0 : index
    %c0_44 = arith.constant 0 : index
    %18 = vector.load %arg1[%c0_40, %c2_41, %c1_42, %c0_43, %c0_44] : memref<1x4x4x5x20xf32, #tpu.memory_space<vmem>>, vector<1x1x1x4x16xf32>
    %19 = vector.shape_cast %18 : vector<1x1x1x4x16xf32> to vector<4x16xf32>
    %c0_45 = arith.constant 0 : index
    %c2_46 = arith.constant 2 : index
    %c2_47 = arith.constant 2 : index
    %c0_48 = arith.constant 0 : index
    %c0_49 = arith.constant 0 : index
    %20 = vector.load %arg1[%c0_45, %c2_46, %c2_47, %c0_48, %c0_49] : memref<1x4x4x5x20xf32, #tpu.memory_space<vmem>>, vector<1x1x1x4x16xf32>
    %21 = vector.shape_cast %20 : vector<1x1x1x4x16xf32> to vector<4x16xf32>
    %22 = tpu.concatenate %5, %7, %9, %11, %13, %15, %17, %19, %21 in 1 : vector<4x16xf32>, vector<4x16xf32>, vector<4x16xf32>, vector<4x16xf32>, vector<4x16xf32>, vector<4x16xf32>, vector<4x16xf32>, vector<4x16xf32>, vector<4x16xf32> -> vector<4x144xf32>
    %23 = arith.truncf %22 : vector<4x144xf32> to vector<4x144xbf16>
    %cst = arith.constant dense<0.000000e+00> : vector<4x32xf32>
    %24 = tpu.matmul %23, %0, %cst {dimension_numbers = #tpu.dot_dimension_numbers<[1], [0], [0], [1], [0, 0, 1, 1], [], []>} : vector<4x144xbf16>, vector<144x32xbf16>, vector<4x32xf32> -> vector<4x32xf32>
    %25 = vector.broadcast %2 : vector<1x32xf32> to vector<4x32xf32>
    %26 = arith.addf %24, %25 : vector<4x32xf32>
    %cst_50 = arith.constant 0.000000e+00 : f32
    %27 = vector.broadcast %cst_50 : f32 to vector<4x32xf32>
    %28 = arith.maximumf %26, %27 : vector<4x32xf32>
    %c0_51 = arith.constant 0 : index
    %c0_52 = arith.constant 0 : index
    %c0_53 = arith.constant 0 : index
    %c0_54 = arith.constant 0 : index
    %c0_55 = arith.constant 0 : index
    %29 = vector.load %arg6[%c0_51, %c0_52, %c0_53, %c0_54, %c0_55] : memref<1x2x2x4x32xf32, #tpu.memory_space<vmem>>, vector<1x1x1x4x32xf32>
    %30 = vector.shape_cast %29 : vector<1x1x1x4x32xf32> to vector<4x32xf32>
    %31 = vector.shape_cast %28 : vector<4x32xf32> to vector<1x1x1x4x32xf32>
    tpu.vector_store %arg6[%c0_51, %c0_52, %c0_53, %c0_54, %c0_55], %31 {strides = array<i32>} : memref<1x2x2x4x32xf32, #tpu.memory_space<vmem>>, vector<1x1x1x4x32xf32>,
    %32 = arith.truncf %28 : vector<4x32xf32> to vector<4x32xbf16>
    %c0_56 = arith.constant 0 : index
    %c0_57 = arith.constant 0 : index
    %c2_58 = arith.constant 2 : index
    %c0_59 = arith.constant 0 : index
    %c0_60 = arith.constant 0 : index
    %33 = vector.load %arg1[%c0_56, %c0_57, %c2_58, %c0_59, %c0_60] : memref<1x4x4x5x20xf32, #tpu.memory_space<vmem>>, vector<1x1x1x4x16xf32>
    %34 = vector.shape_cast %33 : vector<1x1x1x4x16xf32> to vector<4x16xf32>
    %c0_61 = arith.constant 0 : index
    %c0_62 = arith.constant 0 : index
    %c3 = arith.constant 3 : index
    %c0_63 = arith.constant 0 : index
    %c0_64 = arith.constant 0 : index
    %35 = vector.load %arg1[%c0_61, %c0_62, %c3, %c0_63, %c0_64] : memref<1x4x4x5x20xf32, #tpu.memory_space<vmem>>, vector<1x1x1x4x16xf32>
    %36 = vector.shape_cast %35 : vector<1x1x1x4x16xf32> to vector<4x16xf32>
    %c0_65 = arith.constant 0 : index
    %c0_66 = arith.constant 0 : index
    %c0_67 = arith.constant 0 : index
    %c0_68 = arith.constant 0 : index
    %c4 = arith.constant 4 : index
    %37 = vector.load %arg1[%c0_65, %c0_66, %c0_67, %c0_68, %c4] : memref<1x4x4x5x20xf32, #tpu.memory_space<vmem>>, vector<1x1x1x4x16xf32>
    %38 = vector.shape_cast %37 : vector<1x1x1x4x16xf32> to vector<4x16xf32>
    %c0_69 = arith.constant 0 : index
    %c1_70 = arith.constant 1 : index
    %c2_71 = arith.constant 2 : index
    %c0_72 = arith.constant 0 : index
    %c0_73 = arith.constant 0 : index
    %39 = vector.load %arg1[%c0_69, %c1_70, %c2_71, %c0_72, %c0_73] : memref<1x4x4x5x20xf32, #tpu.memory_space<vmem>>, vector<1x1x1x4x16xf32>
    %40 = vector.shape_cast %39 : vector<1x1x1x4x16xf32> to vector<4x16xf32>
    %c0_74 = arith.constant 0 : index
    %c1_75 = arith.constant 1 : index
    %c3_76 = arith.constant 3 : index
    %c0_77 = arith.constant 0 : index
    %c0_78 = arith.constant 0 : index
    %41 = vector.load %arg1[%c0_74, %c1_75, %c3_76, %c0_77, %c0_78] : memref<1x4x4x5x20xf32, #tpu.memory_space<vmem>>, vector<1x1x1x4x16xf32>
    %42 = vector.shape_cast %41 : vector<1x1x1x4x16xf32> to vector<4x16xf32>
    %c0_79 = arith.constant 0 : index
    %c1_80 = arith.constant 1 : index
    %c0_81 = arith.constant 0 : index
    %c0_82 = arith.constant 0 : index
    %c4_83 = arith.constant 4 : index
    %43 = vector.load %arg1[%c0_79, %c1_80, %c0_81, %c0_82, %c4_83] : memref<1x4x4x5x20xf32, #tpu.memory_space<vmem>>, vector<1x1x1x4x16xf32>
    %44 = vector.shape_cast %43 : vector<1x1x1x4x16xf32> to vector<4x16xf32>
    %c0_84 = arith.constant 0 : index
    %c2_85 = arith.constant 2 : index
    %c2_86 = arith.constant 2 : index
    %c0_87 = arith.constant 0 : index
    %c0_88 = arith.constant 0 : index
    %45 = vector.load %arg1[%c0_84, %c2_85, %c2_86, %c0_87, %c0_88] : memref<1x4x4x5x20xf32, #tpu.memory_space<vmem>>, vector<1x1x1x4x16xf32>
    %46 = vector.shape_cast %45 : vector<1x1x1x4x16xf32> to vector<4x16xf32>
    %c0_89 = arith.constant 0 : index
    %c2_90 = arith.constant 2 : index
    %c3_91 = arith.constant 3 : index
    %c0_92 = arith.constant 0 : index
    %c0_93 = arith.constant 0 : index
    %47 = vector.load %arg1[%c0_89, %c2_90, %c3_91, %c0_92, %c0_93] : memref<1x4x4x5x20xf32, #tpu.memory_space<vmem>>, vector<1x1x1x4x16xf32>
    %48 = vector.shape_cast %47 : vector<1x1x1x4x16xf32> to vector<4x16xf32>
    %c0_94 = arith.constant 0 : index
    %c2_95 = arith.constant 2 : index
    %c0_96 = arith.constant 0 : index
    %c0_97 = arith.constant 0 : index
    %c4_98 = arith.constant 4 : index
    %49 = vector.load %arg1[%c0_94, %c2_95, %c0_96, %c0_97, %c4_98] : memref<1x4x4x5x20xf32, #tpu.memory_space<vmem>>, vector<1x1x1x4x16xf32>
    %50 = vector.shape_cast %49 : vector<1x1x1x4x16xf32> to vector<4x16xf32>
    %51 = tpu.concatenate %34, %36, %38, %40, %42, %44, %46, %48, %50 in 1 : vector<4x16xf32>, vector<4x16xf32>, vector<4x16xf32>, vector<4x16xf32>, vector<4x16xf32>, vector<4x16xf32>, vector<4x16xf32>, vector<4x16xf32>, vector<4x16xf32> -> vector<4x144xf32>
    %52 = arith.truncf %51 : vector<4x144xf32> to vector<4x144xbf16>
    %cst_99 = arith.constant dense<0.000000e+00> : vector<4x32xf32>
    %53 = tpu.matmul %52, %0, %cst_99 {dimension_numbers = #tpu.dot_dimension_numbers<[1], [0], [0], [1], [0, 0, 1, 1], [], []>} : vector<4x144xbf16>, vector<144x32xbf16>, vector<4x32xf32> -> vector<4x32xf32>
    %54 = vector.broadcast %2 : vector<1x32xf32> to vector<4x32xf32>
    %55 = arith.addf %53, %54 : vector<4x32xf32>
    %cst_100 = arith.constant 0.000000e+00 : f32
    %56 = vector.broadcast %cst_100 : f32 to vector<4x32xf32>
    %57 = arith.maximumf %55, %56 : vector<4x32xf32>
    %c0_101 = arith.constant 0 : index
    %c0_102 = arith.constant 0 : index
    %c1_103 = arith.constant 1 : index
    %c0_104 = arith.constant 0 : index
    %c0_105 = arith.constant 0 : index
    %58 = vector.load %arg6[%c0_101, %c0_102, %c1_103, %c0_104, %c0_105] : memref<1x2x2x4x32xf32, #tpu.memory_space<vmem>>, vector<1x1x1x4x32xf32>
    %59 = vector.shape_cast %58 : vector<1x1x1x4x32xf32> to vector<4x32xf32>
    %60 = vector.shape_cast %57 : vector<4x32xf32> to vector<1x1x1x4x32xf32>
    tpu.vector_store %arg6[%c0_101, %c0_102, %c1_103, %c0_104, %c0_105], %60 {strides = array<i32>} : memref<1x2x2x4x32xf32, #tpu.memory_space<vmem>>, vector<1x1x1x4x32xf32>,
    %61 = arith.truncf %57 : vector<4x32xf32> to vector<4x32xbf16>
    %c0_106 = arith.constant 0 : index
    %c2_107 = arith.constant 2 : index
    %c0_108 = arith.constant 0 : index
    %c0_109 = arith.constant 0 : index
    %c0_110 = arith.constant 0 : index
    %62 = vector.load %arg1[%c0_106, %c2_107, %c0_108, %c0_109, %c0_110] : memref<1x4x4x5x20xf32, #tpu.memory_space<vmem>>, vector<1x1x1x4x16xf32>
    %63 = vector.shape_cast %62 : vector<1x1x1x4x16xf32> to vector<4x16xf32>
    %c0_111 = arith.constant 0 : index
    %c2_112 = arith.constant 2 : index
    %c1_113 = arith.constant 1 : index
    %c0_114 = arith.constant 0 : index
    %c0_115 = arith.constant 0 : index
    %64 = vector.load %arg1[%c0_111, %c2_112, %c1_113, %c0_114, %c0_115] : memref<1x4x4x5x20xf32, #tpu.memory_space<vmem>>, vector<1x1x1x4x16xf32>
    %65 = vector.shape_cast %64 : vector<1x1x1x4x16xf32> to vector<4x16xf32>
    %c0_116 = arith.constant 0 : index
    %c2_117 = arith.constant 2 : index
    %c2_118 = arith.constant 2 : index
    %c0_119 = arith.constant 0 : index
    %c0_120 = arith.constant 0 : index
    %66 = vector.load %arg1[%c0_116, %c2_117, %c2_118, %c0_119, %c0_120] : memref<1x4x4x5x20xf32, #tpu.memory_space<vmem>>, vector<1x1x1x4x16xf32>
    %67 = vector.shape_cast %66 : vector<1x1x1x4x16xf32> to vector<4x16xf32>
    %c0_121 = arith.constant 0 : index
    %c3_122 = arith.constant 3 : index
    %c0_123 = arith.constant 0 : index
    %c0_124 = arith.constant 0 : index
    %c0_125 = arith.constant 0 : index
    %68 = vector.load %arg1[%c0_121, %c3_122, %c0_123, %c0_124, %c0_125] : memref<1x4x4x5x20xf32, #tpu.memory_space<vmem>>, vector<1x1x1x4x16xf32>
    %69 = vector.shape_cast %68 : vector<1x1x1x4x16xf32> to vector<4x16xf32>
    %c0_126 = arith.constant 0 : index
    %c3_127 = arith.constant 3 : index
    %c1_128 = arith.constant 1 : index
    %c0_129 = arith.constant 0 : index
    %c0_130 = arith.constant 0 : index
    %70 = vector.load %arg1[%c0_126, %c3_127, %c1_128, %c0_129, %c0_130] : memref<1x4x4x5x20xf32, #tpu.memory_space<vmem>>, vector<1x1x1x4x16xf32>
    %71 = vector.shape_cast %70 : vector<1x1x1x4x16xf32> to vector<4x16xf32>
    %c0_131 = arith.constant 0 : index
    %c3_132 = arith.constant 3 : index
    %c2_133 = arith.constant 2 : index
    %c0_134 = arith.constant 0 : index
    %c0_135 = arith.constant 0 : index
    %72 = vector.load %arg1[%c0_131, %c3_132, %c2_133, %c0_134, %c0_135] : memref<1x4x4x5x20xf32, #tpu.memory_space<vmem>>, vector<1x1x1x4x16xf32>
    %73 = vector.shape_cast %72 : vector<1x1x1x4x16xf32> to vector<4x16xf32>
    %c0_136 = arith.constant 0 : index
    %c0_137 = arith.constant 0 : index
    %c0_138 = arith.constant 0 : index
    %c1_139 = arith.constant 1 : index
    %c0_140 = arith.constant 0 : index
    %74 = vector.load %arg1[%c0_136, %c0_137, %c0_138, %c1_139, %c0_140] : memref<1x4x4x5x20xf32, #tpu.memory_space<vmem>>, vector<1x1x1x4x16xf32>
    %75 = vector.shape_cast %74 : vector<1x1x1x4x16xf32> to vector<4x16xf32>
    %c0_141 = arith.constant 0 : index
    %c0_142 = arith.constant 0 : index
    %c1_143 = arith.constant 1 : index
    %c1_144 = arith.constant 1 : index
    %c0_145 = arith.constant 0 : index
    %76 = vector.load %arg1[%c0_141, %c0_142, %c1_143, %c1_144, %c0_145] : memref<1x4x4x5x20xf32, #tpu.memory_space<vmem>>, vector<1x1x1x4x16xf32>
    %77 = vector.shape_cast %76 : vector<1x1x1x4x16xf32> to vector<4x16xf32>
    %c0_146 = arith.constant 0 : index
    %c0_147 = arith.constant 0 : index
    %c2_148 = arith.constant 2 : index
    %c1_149 = arith.constant 1 : index
    %c0_150 = arith.constant 0 : index
    %78 = vector.load %arg1[%c0_146, %c0_147, %c2_148, %c1_149, %c0_150] : memref<1x4x4x5x20xf32, #tpu.memory_space<vmem>>, vector<1x1x1x4x16xf32>
    %79 = vector.shape_cast %78 : vector<1x1x1x4x16xf32> to vector<4x16xf32>
    %80 = tpu.concatenate %63, %65, %67, %69, %71, %73, %75, %77, %79 in 1 : vector<4x16xf32>, vector<4x16xf32>, vector<4x16xf32>, vector<4x16xf32>, vector<4x16xf32>, vector<4x16xf32>, vector<4x16xf32>, vector<4x16xf32>, vector<4x16xf32> -> vector<4x144xf32>
    %81 = arith.truncf %80 : vector<4x144xf32> to vector<4x144xbf16>
    %cst_151 = arith.constant dense<0.000000e+00> : vector<4x32xf32>
    %82 = tpu.matmul %81, %0, %cst_151 {dimension_numbers = #tpu.dot_dimension_numbers<[1], [0], [0], [1], [0, 0, 1, 1], [], []>} : vector<4x144xbf16>, vector<144x32xbf16>, vector<4x32xf32> -> vector<4x32xf32>
    %83 = vector.broadcast %2 : vector<1x32xf32> to vector<4x32xf32>
    %84 = arith.addf %82, %83 : vector<4x32xf32>
    %cst_152 = arith.constant 0.000000e+00 : f32
    %85 = vector.broadcast %cst_152 : f32 to vector<4x32xf32>
    %86 = arith.maximumf %84, %85 : vector<4x32xf32>
    %c0_153 = arith.constant 0 : index
    %c1_154 = arith.constant 1 : index
    %c0_155 = arith.constant 0 : index
    %c0_156 = arith.constant 0 : index
    %c0_157 = arith.constant 0 : index
    %87 = vector.load %arg6[%c0_153, %c1_154, %c0_155, %c0_156, %c0_157] : memref<1x2x2x4x32xf32, #tpu.memory_space<vmem>>, vector<1x1x1x4x32xf32>
    %88 = vector.shape_cast %87 : vector<1x1x1x4x32xf32> to vector<4x32xf32>
    %89 = vector.shape_cast %86 : vector<4x32xf32> to vector<1x1x1x4x32xf32>
    tpu.vector_store %arg6[%c0_153, %c1_154, %c0_155, %c0_156, %c0_157], %89 {strides = array<i32>} : memref<1x2x2x4x32xf32, #tpu.memory_space<vmem>>, vector<1x1x1x4x32xf32>,
    %90 = arith.truncf %86 : vector<4x32xf32> to vector<4x32xbf16>
    %c0_158 = arith.constant 0 : index
    %c2_159 = arith.constant 2 : index
    %c2_160 = arith.constant 2 : index
    %c0_161 = arith.constant 0 : index
    %c0_162 = arith.constant 0 : index
    %91 = vector.load %arg1[%c0_158, %c2_159, %c2_160, %c0_161, %c0_162] : memref<1x4x4x5x20xf32, #tpu.memory_space<vmem>>, vector<1x1x1x4x16xf32>
    %92 = vector.shape_cast %91 : vector<1x1x1x4x16xf32> to vector<4x16xf32>
    %c0_163 = arith.constant 0 : index
    %c2_164 = arith.constant 2 : index
    %c3_165 = arith.constant 3 : index
    %c0_166 = arith.constant 0 : index
    %c0_167 = arith.constant 0 : index
    %93 = vector.load %arg1[%c0_163, %c2_164, %c3_165, %c0_166, %c0_167] : memref<1x4x4x5x20xf32, #tpu.memory_space<vmem>>, vector<1x1x1x4x16xf32>
    %94 = vector.shape_cast %93 : vector<1x1x1x4x16xf32> to vector<4x16xf32>
    %c0_168 = arith.constant 0 : index
    %c2_169 = arith.constant 2 : index
    %c0_170 = arith.constant 0 : index
    %c0_171 = arith.constant 0 : index
    %c4_172 = arith.constant 4 : index
    %95 = vector.load %arg1[%c0_168, %c2_169, %c0_170, %c0_171, %c4_172] : memref<1x4x4x5x20xf32, #tpu.memory_space<vmem>>, vector<1x1x1x4x16xf32>
    %96 = vector.shape_cast %95 : vector<1x1x1x4x16xf32> to vector<4x16xf32>
    %c0_173 = arith.constant 0 : index
    %c3_174 = arith.constant 3 : index
    %c2_175 = arith.constant 2 : index
    %c0_176 = arith.constant 0 : index
    %c0_177 = arith.constant 0 : index
    %97 = vector.load %arg1[%c0_173, %c3_174, %c2_175, %c0_176, %c0_177] : memref<1x4x4x5x20xf32, #tpu.memory_space<vmem>>, vector<1x1x1x4x16xf32>
    %98 = vector.shape_cast %97 : vector<1x1x1x4x16xf32> to vector<4x16xf32>
    %c0_178 = arith.constant 0 : index
    %c3_179 = arith.constant 3 : index
    %c3_180 = arith.constant 3 : index
    %c0_181 = arith.constant 0 : index
    %c0_182 = arith.constant 0 : index
    %99 = vector.load %arg1[%c0_178, %c3_179, %c3_180, %c0_181, %c0_182] : memref<1x4x4x5x20xf32, #tpu.memory_space<vmem>>, vector<1x1x1x4x16xf32>
    %100 = vector.shape_cast %99 : vector<1x1x1x4x16xf32> to vector<4x16xf32>
    %c0_183 = arith.constant 0 : index
    %c3_184 = arith.constant 3 : index
    %c0_185 = arith.constant 0 : index
    %c0_186 = arith.constant 0 : index
    %c4_187 = arith.constant 4 : index
    %101 = vector.load %arg1[%c0_183, %c3_184, %c0_185, %c0_186, %c4_187] : memref<1x4x4x5x20xf32, #tpu.memory_space<vmem>>, vector<1x1x1x4x16xf32>
    %102 = vector.shape_cast %101 : vector<1x1x1x4x16xf32> to vector<4x16xf32>
    %c0_188 = arith.constant 0 : index
    %c0_189 = arith.constant 0 : index
    %c2_190 = arith.constant 2 : index
    %c1_191 = arith.constant 1 : index
    %c0_192 = arith.constant 0 : index
    %103 = vector.load %arg1[%c0_188, %c0_189, %c2_190, %c1_191, %c0_192] : memref<1x4x4x5x20xf32, #tpu.memory_space<vmem>>, vector<1x1x1x4x16xf32>
    %104 = vector.shape_cast %103 : vector<1x1x1x4x16xf32> to vector<4x16xf32>
    %c0_193 = arith.constant 0 : index
    %c0_194 = arith.constant 0 : index
    %c3_195 = arith.constant 3 : index
    %c1_196 = arith.constant 1 : index
    %c0_197 = arith.constant 0 : index
    %105 = vector.load %arg1[%c0_193, %c0_194, %c3_195, %c1_196, %c0_197] : memref<1x4x4x5x20xf32, #tpu.memory_space<vmem>>, vector<1x1x1x4x16xf32>
    %106 = vector.shape_cast %105 : vector<1x1x1x4x16xf32> to vector<4x16xf32>
    %c0_198 = arith.constant 0 : index
    %c0_199 = arith.constant 0 : index
    %c0_200 = arith.constant 0 : index
    %c1_201 = arith.constant 1 : index
    %c4_202 = arith.constant 4 : index
    %107 = vector.load %arg1[%c0_198, %c0_199, %c0_200, %c1_201, %c4_202] : memref<1x4x4x5x20xf32, #tpu.memory_space<vmem>>, vector<1x1x1x4x16xf32>
    %108 = vector.shape_cast %107 : vector<1x1x1x4x16xf32> to vector<4x16xf32>
    %109 = tpu.concatenate %92, %94, %96, %98, %100, %102, %104, %106, %108 in 1 : vector<4x16xf32>, vector<4x16xf32>, vector<4x16xf32>, vector<4x16xf32>, vector<4x16xf32>, vector<4x16xf32>, vector<4x16xf32>, vector<4x16xf32>, vector<4x16xf32> -> vector<4x144xf32>
    %110 = arith.truncf %109 : vector<4x144xf32> to vector<4x144xbf16>
    %cst_203 = arith.constant dense<0.000000e+00> : vector<4x32xf32>
    %111 = tpu.matmul %110, %0, %cst_203 {dimension_numbers = #tpu.dot_dimension_numbers<[1], [0], [0], [1], [0, 0, 1, 1], [], []>} : vector<4x144xbf16>, vector<144x32xbf16>, vector<4x32xf32> -> vector<4x32xf32>
    %112 = vector.broadcast %2 : vector<1x32xf32> to vector<4x32xf32>
    %113 = arith.addf %111, %112 : vector<4x32xf32>
    %cst_204 = arith.constant 0.000000e+00 : f32
    %114 = vector.broadcast %cst_204 : f32 to vector<4x32xf32>
    %115 = arith.maximumf %113, %114 : vector<4x32xf32>
    %c0_205 = arith.constant 0 : index
    %c1_206 = arith.constant 1 : index
    %c1_207 = arith.constant 1 : index
    %c0_208 = arith.constant 0 : index
    %c0_209 = arith.constant 0 : index
    %116 = vector.load %arg6[%c0_205, %c1_206, %c1_207, %c0_208, %c0_209] : memref<1x2x2x4x32xf32, #tpu.memory_space<vmem>>, vector<1x1x1x4x32xf32>
    %117 = vector.shape_cast %116 : vector<1x1x1x4x32xf32> to vector<4x32xf32>
    %118 = vector.shape_cast %115 : vector<4x32xf32> to vector<1x1x1x4x32xf32>
    tpu.vector_store %arg6[%c0_205, %c1_206, %c1_207, %c0_208, %c0_209], %118 {strides = array<i32>} : memref<1x2x2x4x32xf32, #tpu.memory_space<vmem>>, vector<1x1x1x4x32xf32>,
    %119 = arith.truncf %115 : vector<4x32xf32> to vector<4x32xbf16>
    %cst_210 = arith.constant 0.000000e+00 : bf16
    %120 = vector.broadcast %cst_210 : bf16 to vector<1x32xbf16>
    %cst_211 = arith.constant 0.000000e+00 : bf16
    %121 = vector.broadcast %cst_211 : bf16 to vector<4x8xbf16>
    %122 = vector.extract_strided_slice %119 {offsets = [0, 0], sizes = [3, 32], strides = [1, 1]} : vector<4x32xbf16> to vector<3x32xbf16>
    %123 = tpu.concatenate %120, %122 in 0 : vector<1x32xbf16>, vector<3x32xbf16> -> vector<4x32xbf16>
    %124 = vector.extract_strided_slice %123 {offsets = [0, 0], sizes = [4, 24], strides = [1, 1]} : vector<4x32xbf16> to vector<4x24xbf16>
    %125 = tpu.concatenate %121, %124 in 1 : vector<4x8xbf16>, vector<4x24xbf16> -> vector<4x32xbf16>
    %126 = vector.extract_strided_slice %90 {offsets = [0, 0], sizes = [3, 32], strides = [1, 1]} : vector<4x32xbf16> to vector<3x32xbf16>
    %127 = tpu.concatenate %120, %126 in 0 : vector<1x32xbf16>, vector<3x32xbf16> -> vector<4x32xbf16>
    %128 = vector.extract_strided_slice %119 {offsets = [0, 0], sizes = [3, 32], strides = [1, 1]} : vector<4x32xbf16> to vector<3x32xbf16>
    %129 = tpu.concatenate %120, %128 in 0 : vector<1x32xbf16>, vector<3x32xbf16> -> vector<4x32xbf16>
    %130 = vector.extract_strided_slice %61 {offsets = [0, 0], sizes = [4, 24], strides = [1, 1]} : vector<4x32xbf16> to vector<4x24xbf16>
    %131 = tpu.concatenate %121, %130 in 1 : vector<4x8xbf16>, vector<4x24xbf16> -> vector<4x32xbf16>
    %132 = vector.extract_strided_slice %119 {offsets = [0, 0], sizes = [4, 24], strides = [1, 1]} : vector<4x32xbf16> to vector<4x24xbf16>
    %133 = tpu.concatenate %121, %132 in 1 : vector<4x8xbf16>, vector<4x24xbf16> -> vector<4x32xbf16>
    %134 = tpu.concatenate %125, %127, %129, %131, %32, %61, %133, %90, %119 in 1 : vector<4x32xbf16>, vector<4x32xbf16>, vector<4x32xbf16>, vector<4x32xbf16>, vector<4x32xbf16>, vector<4x32xbf16>, vector<4x32xbf16>, vector<4x32xbf16>, vector<4x32xbf16> -> vector<4x288xbf16>
    %cst_212 = arith.constant dense<0.000000e+00> : vector<4x64xf32>
    %135 = tpu.matmul %134, %1, %cst_212 {dimension_numbers = #tpu.dot_dimension_numbers<[1], [0], [0], [1], [0, 0, 1, 1], [], []>} : vector<4x288xbf16>, vector<288x64xbf16>, vector<4x64xf32> -> vector<4x64xf32>
    %136 = vector.broadcast %3 : vector<1x64xf32> to vector<4x64xf32>
    %137 = arith.addf %135, %136 : vector<4x64xf32>
    %cst_213 = arith.constant 0.000000e+00 : f32
    %138 = vector.broadcast %cst_213 : f32 to vector<4x64xf32>
    %139 = arith.maximumf %137, %138 : vector<4x64xf32>
    %c0_214 = arith.constant 0 : index
    %c0_215 = arith.constant 0 : index
    %c0_216 = arith.constant 0 : index
    %140 = vector.load %arg7[%c0_214, %c0_215, %c0_216] : memref<1x4x64xf32, #tpu.memory_space<vmem>>, vector<1x4x64xf32>
    %141 = vector.shape_cast %140 : vector<1x4x64xf32> to vector<4x64xf32>
    %142 = vector.shape_cast %139 : vector<4x64xf32> to vector<1x4x64xf32>
    tpu.vector_store %arg7[%c0_214, %c0_215, %c0_216], %142 {strides = array<i32>} : memref<1x4x64xf32, #tpu.memory_space<vmem>>, vector<1x4x64xf32>,
    return
  }
  func.func @transform_0(%arg0: i32) -> (i32, i32, i32, i32, i32) {
    %c0_i32 = arith.constant 0 : i32
    %c0_i32_0 = arith.constant 0 : i32
    %c0_i32_1 = arith.constant 0 : i32
    %c0_i32_2 = arith.constant 0 : i32
    %c0_i32_3 = arith.constant 0 : i32
    return %arg0, %c0_i32, %c0_i32_0, %c0_i32_1, %c0_i32_2 : i32, i32, i32, i32, i32
  }
  func.func @transform_1(%arg0: i32) -> (i32, i32) {
    %c0_i32 = arith.constant 0 : i32
    %c0_i32_0 = arith.constant 0 : i32
    %c0_i32_1 = arith.constant 0 : i32
    return %c0_i32, %c0_i32_0 : i32, i32
  }
  func.func @transform_2(%arg0: i32) -> (i32, i32) {
    %c0_i32 = arith.constant 0 : i32
    %c0_i32_0 = arith.constant 0 : i32
    %c0_i32_1 = arith.constant 0 : i32
    return %c0_i32, %c0_i32_0 : i32, i32
  }
  func.func @transform_3(%arg0: i32) -> (i32, i32) {
    %c0_i32 = arith.constant 0 : i32
    %c0_i32_0 = arith.constant 0 : i32
    %c0_i32_1 = arith.constant 0 : i32
    return %c0_i32, %c0_i32_0 : i32, i32
  }
  func.func @transform_4(%arg0: i32) -> (i32, i32) {
    %c0_i32 = arith.constant 0 : i32
    %c0_i32_0 = arith.constant 0 : i32
    %c0_i32_1 = arith.constant 0 : i32
    return %c0_i32, %c0_i32_0 : i32, i32
  }
  func.func @transform_5(%arg0: i32) -> (i32, i32, i32, i32, i32) {
    %c0_i32 = arith.constant 0 : i32
    %c0_i32_0 = arith.constant 0 : i32
    %c0_i32_1 = arith.constant 0 : i32
    %c0_i32_2 = arith.constant 0 : i32
    %c0_i32_3 = arith.constant 0 : i32
    return %arg0, %c0_i32, %c0_i32_0, %c0_i32_1, %c0_i32_2 : i32, i32, i32, i32, i32
  }
  func.func @transform_6(%arg0: i32) -> (i32, i32, i32) {
    %c0_i32 = arith.constant 0 : i32
    %c0_i32_0 = arith.constant 0 : i32
    %c0_i32_1 = arith.constant 0 : i32
    return %arg0, %c0_i32, %c0_i32_0 : i32, i32, i32
  }
}

</mosaic_0001>

<llo_original>
// kernel: _fused_forward.1
$region0: #{_fused_forward.1}
  #allocation0 [shape = 'u32[]', space=smem, size = 0x4, offset = 0x4, fixed_abs, tag = 'smem constant byte address 0x4 - core index']
  #allocation1 [shape = 'u32[72,128]{1,0:T(1,128)}', space=vmem, size = 0x9000, scoped, tag = 'internal scratch']
  %s0 = inlined_call_operand.vmem [shape: f32[2,4,4,5,20], index: 0, kind: input, shape index: {}]
  %s1 = inlined_call_operand.vmem [shape: bf16[144,32], index: 1, kind: input, shape index: {}]
  %s2 = inlined_call_operand.vmem [shape: f32[1,32], index: 2, kind: input, shape index: {}]
  %s3 = inlined_call_operand.vmem [shape: bf16[288,64], index: 3, kind: input, shape index: {}]
  %s4 = inlined_call_operand.vmem [shape: f32[1,64], index: 4, kind: input, shape index: {}]
  %s5 = inlined_call_operand.vmem [shape: f32[2,2,2,4,32], index: 5, kind: output, shape index: {0}]
  %s6 = inlined_call_operand.vmem [shape: f32[2,4,64], index: 6, kind: output, shape index: {1}]
  %7 = xla_tuple %s5, %s6
  %s8 = sld [smem:[#allocation0]]
  $region61: #{_fused_forward.1} parent=0
    _
  %s10 = ssub.s32 1, %s8
  %s11 = scalar_select 0, %s10, %s8
  loop: start=0, step=1, limit=4
  $region2: #{_fused_forward.1} parent=0 // loop_pre_header
    _
  $region3: #{_fused_forward.1} parent=0 // loop_header
    %s13 = sphi 0, %s17
    %p14 = scmp.ge.s32.totalorder %s13, 4
    %s23 = sphi 0, %s25
    %s26 = sphi 0, %s23
    %s27 = sphi 0, %s26
    %s43 = sphi 0, %s27
    %s47 = sphi 0, %s47
    %s49 = sphi 0, %s47
    %s50 = sphi 0, %s49
    %s64 = sphi 0, %s50
    %s68 = sphi 0, %s68
    %s70 = sphi 0, %s68
    %s71 = sphi 0, %s70
    %s85 = sphi 0, %s71
    %s89 = sphi 0, %s89
    %s91 = sphi 0, %s89
    %s92 = sphi 0, %s91
    %s106 = sphi 0, %s92
    %s110 = sphi 0, %s110
    %s112 = sphi 0, %s110
    %s113 = sphi 0, %s112
    %s127 = sphi 0, %s113
    %s133 = sphi 0, %s135
    %s136 = sphi 0, %s133
    %s137 = sphi 0, %s136
    %s153 = sphi 0, %s137
    %s159 = sphi 0, %s161
    %s162 = sphi 0, %s159
    %s163 = sphi 0, %s162
    %s179 = sphi 0, %s163
  $region4: #{_fused_forward.1} parent=0 // loop_header_branch
    %16 = sbr.rel (%p14) target = $region8
  $region5: #{_fused_forward.1} parent=0 // loop_body
    %s18 = ssub.s32 %s13, 1
    %s19 = ssub.s32 %s13, 2
    %s20 = sadd.s32 %s13, 1
    %s21 = ssub.s32 %s13, %s20
    %p22 = scmp.eq.s32.totalorder %s21, 0
    %s24 = sadd.s32 %s23, 1
    %s25 = scalar_select %p22, %s23, %s24
    %p28 = pneg %p22
    %p29 = scmp.eq.s32.totalorder %s13, 1
    %p30 = por %p28, %p29
    %p31 = scmp.ne.s32.totalorder %s23, %s26
    %p32 = scmp.eq.s32.totalorder %s13, 0
    %p33 = por %p31, %p32
    %p34 = scmp.ne.s32.totalorder %s23, %s26
    %p35 = scmp.eq.s32.totalorder %s18, 1
    %p36 = por %p34, %p35
    %p37 = scmp.ne.s32.totalorder %s26, %s27
    %p38 = scmp.eq.s32.totalorder %s18, 0
    %p39 = por %p37, %p38
    %p40 = scmp.ne.s32.totalorder %s26, %s27
    %p41 = scmp.eq.s32.totalorder %s19, 1
    %p42 = por %p40, %p41
    %p44 = scmp.ne.s32.totalorder %s27, %s43
    %p45 = scmp.eq.s32.totalorder %s19, 0
    %p46 = por %p44, %p45
    %s48 = sadd.s32 %s47, 1
    %p51 = scmp.eq.s32.totalorder %s13, 1
    %p52 = scmp.ne.s32.totalorder %s47, %s49
    %p53 = scmp.eq.s32.totalorder %s13, 0
    %p54 = por %p52, %p53
    %p55 = scmp.ne.s32.totalorder %s47, %s49
    %p56 = scmp.eq.s32.totalorder %s18, 1
    %p57 = por %p55, %p56
    %p58 = scmp.ne.s32.totalorder %s49, %s50
    %p59 = scmp.eq.s32.totalorder %s18, 0
    %p60 = por %p58, %p59
    %p61 = scmp.ne.s32.totalorder %s49, %s50
    %p62 = scmp.eq.s32.totalorder %s19, 1
    %p63 = por %p61, %p62
    %p65 = scmp.ne.s32.totalorder %s50, %s64
    %p66 = scmp.eq.s32.totalorder %s19, 0
    %p67 = por %p65, %p66
    %s69 = sadd.s32 %s68, 1
    %p72 = scmp.eq.s32.totalorder %s13, 1
    %p73 = scmp.ne.s32.totalorder %s68, %s70
    %p74 = scmp.eq.s32.totalorder %s13, 0
    %p75 = por %p73, %p74
    %p76 = scmp.ne.s32.totalorder %s68, %s70
    %p77 = scmp.eq.s32.totalorder %s18, 1
    %p78 = por %p76, %p77
    %p79 = scmp.ne.s32.totalorder %s70, %s71
    %p80 = scmp.eq.s32.totalorder %s18, 0
    %p81 = por %p79, %p80
    %p82 = scmp.ne.s32.totalorder %s70, %s71
    %p83 = scmp.eq.s32.totalorder %s19, 1
    %p84 = por %p82, %p83
    %p86 = scmp.ne.s32.totalorder %s71, %s85
    %p87 = scmp.eq.s32.totalorder %s19, 0
    %p88 = por %p86, %p87
    %s90 = sadd.s32 %s89, 1
    %p93 = scmp.eq.s32.totalorder %s13, 1
    %p94 = scmp.ne.s32.totalorder %s89, %s91
    %p95 = scmp.eq.s32.totalorder %s13, 0
    %p96 = por %p94, %p95
    %p97 = scmp.ne.s32.totalorder %s89, %s91
    %p98 = scmp.eq.s32.totalorder %s18, 1
    %p99 = por %p97, %p98
    %p100 = scmp.ne.s32.totalorder %s91, %s92
    %p101 = scmp.eq.s32.totalorder %s18, 0
    %p102 = por %p100, %p101
    %p103 = scmp.ne.s32.totalorder %s91, %s92
    %p104 = scmp.eq.s32.totalorder %s19, 1
    %p105 = por %p103, %p104
    %p107 = scmp.ne.s32.totalorder %s92, %s106
    %p108 = scmp.eq.s32.totalorder %s19, 0
    %p109 = por %p107, %p108
    %s111 = sadd.s32 %s110, 1
    %p114 = scmp.eq.s32.totalorder %s13, 1
    %p115 = scmp.ne.s32.totalorder %s110, %s112
    %p116 = scmp.eq.s32.totalorder %s13, 0
    %p117 = por %p115, %p116
    %p118 = scmp.ne.s32.totalorder %s110, %s112
    %p119 = scmp.eq.s32.totalorder %s18, 1
    %p120 = por %p118, %p119
    %p121 = scmp.ne.s32.totalorder %s112, %s113
    %p122 = scmp.eq.s32.totalorder %s18, 0
    %p123 = por %p121, %p122
    %p124 = scmp.ne.s32.totalorder %s112, %s113
    %p125 = scmp.eq.s32.totalorder %s19, 1
    %p126 = por %p124, %p125
    %p128 = scmp.ne.s32.totalorder %s113, %s127
    %p129 = scmp.eq.s32.totalorder %s19, 0
    %p130 = por %p128, %p129
    %s131 = ssub.s32 %s13, %s20
    %p132 = scmp.eq.s32.totalorder %s131, 0
    %s134 = sadd.s32 %s133, 1
    %s135 = scalar_select %p132, %s133, %s134
    %p138 = pneg %p132
    %p139 = scmp.eq.s32.totalorder %s13, 1
    %p140 = por %p138, %p139
    %p141 = scmp.ne.s32.totalorder %s133, %s136
    %p142 = scmp.eq.s32.totalorder %s13, 0
    %p143 = por %p141, %p142
    %p144 = scmp.ne.s32.totalorder %s133, %s136
    %p145 = scmp.eq.s32.totalorder %s18, 1
    %p146 = por %p144, %p145
    %p147 = scmp.ne.s32.totalorder %s136, %s137
    %p148 = scmp.eq.s32.totalorder %s18, 0
    %p149 = por %p147, %p148
    %p150 = scmp.ne.s32.totalorder %s136, %s137
    %p151 = scmp.eq.s32.totalorder %s19, 1
    %p152 = por %p150, %p151
    %p154 = scmp.ne.s32.totalorder %s137, %s153
    %p155 = scmp.eq.s32.totalorder %s19, 0
    %p156 = por %p154, %p155
    %s157 = ssub.s32 %s13, %s20
    %p158 = scmp.eq.s32.totalorder %s157, 0
    %s160 = sadd.s32 %s159, 1
    %s161 = scalar_select %p158, %s159, %s160
    %p164 = pneg %p158
    %p165 = scmp.eq.s32.totalorder %s13, 1
    %p166 = por %p164, %p165
    %p167 = scmp.ne.s32.totalorder %s159, %s162
    %p168 = scmp.eq.s32.totalorder %s13, 0
    %p169 = por %p167, %p168
    %p170 = scmp.ne.s32.totalorder %s159, %s162
    %p171 = scmp.eq.s32.totalorder %s18, 1
    %p172 = por %p170, %p171
    %p173 = scmp.ne.s32.totalorder %s162, %s163
    %p174 = scmp.eq.s32.totalorder %s18, 0
    %p175 = por %p173, %p174
    %p176 = scmp.ne.s32.totalorder %s162, %s163
    %p177 = scmp.eq.s32.totalorder %s19, 1
    %p178 = por %p176, %p177
    %p180 = scmp.ne.s32.totalorder %s163, %s179
    %p181 = scmp.eq.s32.totalorder %s19, 0
    %p182 = por %p180, %p181
    %p183 = scmp.le.s32.totalorder 1, %s13
    %p184 = scmp.lt.s32.totalorder %s13, 3
    %p185 = pnand %p183, %p184
    %p186 = pneg %p185
    // Predicated region
    $region9: #{_fused_forward.1} parent=5 // pred_check
      _
    $region10: #{_fused_forward.1} parent=5 // pred_check_branch
      %188 = sbr.rel (%p185) target = $region12
    $region11: #{_fused_forward.1} parent=5 // pred_region
      %s189 = ssub.s32 %s13, 1
      // Predicated region
      $region13: #{_fused_forward.1} parent=11 // pred_check
        %p190 = pneg %p60
      $region14: #{_fused_forward.1} parent=11 // pred_check_branch
        %192 = sbr.rel (%p190) target = $region16
      $region15: #{_fused_forward.1} parent=11 // pred_region
        _
      $region16: #{_fused_forward.1} parent=11 // pred_fallthru
        _
      // Predicated region
      $region17: #{_fused_forward.1} parent=11 // pred_check
        %p193 = pneg %p81
      $region18: #{_fused_forward.1} parent=11 // pred_check_branch
        %195 = sbr.rel (%p193) target = $region20
      $region19: #{_fused_forward.1} parent=11 // pred_region
        _
      $region20: #{_fused_forward.1} parent=11 // pred_fallthru
        _
      // Predicated region
      $region21: #{_fused_forward.1} parent=11 // pred_check
        %p196 = pneg %p102
      $region22: #{_fused_forward.1} parent=11 // pred_check_branch
        %198 = sbr.rel (%p196) target = $region24
      $region23: #{_fused_forward.1} parent=11 // pred_region
        _
      $region24: #{_fused_forward.1} parent=11 // pred_fallthru
        _
      // Predicated region
      $region25: #{_fused_forward.1} parent=11 // pred_check
        %p199 = pneg %p123
      $region26: #{_fused_forward.1} parent=11 // pred_check_branch
        %201 = sbr.rel (%p199) target = $region28
      $region27: #{_fused_forward.1} parent=11 // pred_region
        _
      $region28: #{_fused_forward.1} parent=11 // pred_fallthru
        _
    $region12: #{_fused_forward.1} parent=5 // pred_fallthru
      _
    %p202 = scmp.lt.s32.totalorder %s13, 2
    // Predicated region
    $region29: #{_fused_forward.1} parent=5 // pred_check
      %p203 = pneg %p202
    $region30: #{_fused_forward.1} parent=5 // pred_check_branch
      %205 = sbr.rel (%p203) target = $region32
    $region31: #{_fused_forward.1} parent=5 // pred_region
      // Predicated region
      $region33: #{_fused_forward.1} parent=31 // pred_check
        %p206 = pneg %p33
      $region34: #{_fused_forward.1} parent=31 // pred_check_branch
        %208 = sbr.rel (%p206) target = $region36
      $region35: #{_fused_forward.1} parent=31 // pred_region
        %p209 = scmp.lt.s32.totalorder %s13, 1
        %s210 = scalar_select %p209, %s13, 1
        %s211 = smul.addr %s210, 16
        %s212 = smul.addr %s211, 8
        %s213 = scalar_lea.vmem %s0, %s212
      $region36: #{_fused_forward.1} parent=31 // pred_fallthru
        _
    $region32: #{_fused_forward.1} parent=5 // pred_fallthru
      _
    %p214 = scmp.le.s32.totalorder 1, %s13
    %p215 = scmp.lt.s32.totalorder %s13, 3
    %p216 = pnand %p214, %p215
    %p217 = pneg %p216
    // Predicated region
    $region37: #{_fused_forward.1} parent=5 // pred_check
      _
    $region38: #{_fused_forward.1} parent=5 // pred_check_branch
      %219 = sbr.rel (%p216) target = $region40
    $region39: #{_fused_forward.1} parent=5 // pred_region
      %s220 = ssub.s32 %s13, 1
      %p221 = scmp.lt.s32.totalorder %s18, 1
      %s222 = scalar_select %p221, %s18, 1
      %s223 = smul.addr %s222, 16
      %s224 = smul.addr %s223, 8
      %s225 = scalar_lea.vmem %s0, %s224
      %p226 = pneg %p39
      %p227 = pneg %p36
      %p228 = pneg %p60
      %p229 = pneg %p57
      %p230 = pneg %p81
      %p231 = pneg %p78
      %p232 = pneg %p102
      %p233 = pneg %p99
      %p234 = pneg %p123
      %p235 = pneg %p120
      %p236 = pneg %p149
      %p237 = pneg %p146
      %p238 = scmp.lt.s32.totalorder %s18, 1
      %s239 = scalar_select %p238, %s18, 1
      %s240 = smul.addr %s239, 4
      %s241 = smul.addr %s240, 4
      %s242 = scalar_lea.vmem %s5, %s241
      %p243 = pneg %p175
      %p244 = pneg %p172
      %p245 = scmp.lt.s32.totalorder %s18, 1
      %s246 = scalar_select %p245, %s18, 1
      %s247 = smul.addr %s246, 4
      %s248 = scalar_lea.vmem %s6, %s247
      %p249 = scmp.lt.s32.totalorder %s18, 1
      %s250 = scalar_select %p249, %s18, 1
      %s251 = smul.addr %s250, 16
      %s252 = smul.addr %s251, 8
      %s253 = scalar_lea.vmem %s0, %s252
      %p254 = scmp.lt.s32.totalorder %s18, 1
      %s255 = scalar_select %p254, %s18, 1
      %s256 = smul.addr %s255, 4
      %s257 = smul.addr %s256, 4
      %s258 = scalar_lea.vmem %s5, %s257
      %p259 = scmp.lt.s32.totalorder %s18, 1
      %s260 = scalar_select %p259, %s18, 1
      %s261 = smul.addr %s260, 4
      %s262 = scalar_lea.vmem %s6, %s261
      %v264 = vld [vmem:[%s1] sm:$0xf]
      %v265 = vld [vmem:[%s1 + $0x4] sm:$0xf]
      %v266 = vld [vmem:[%s1 + $0x8] sm:$0xf]
      %v267 = vld [vmem:[%s1 + $0xc] sm:$0xf]
      %v268 = vld [vmem:[%s1 + $0x10] sm:$0xf]
      %v269 = vld [vmem:[%s1 + $0x14] sm:$0xf]
      %v270 = vld [vmem:[%s1 + $0x18] sm:$0xf]
      %v271 = vld [vmem:[%s1 + $0x1c] sm:$0xf]
      %v272 = vld [vmem:[%s1 + $0x20] sm:$0xf]
      %v273 = vld [vmem:[%s1 + $0x24] sm:$0xf]
      %v274 = vld [vmem:[%s1 + $0x28] sm:$0xf]
      %v275 = vld [vmem:[%s1 + $0x2c] sm:$0xf]
      %v276 = vld [vmem:[%s1 + $0x30] sm:$0xf]
      %v277 = vld [vmem:[%s1 + $0x34] sm:$0xf]
      %v278 = vld [vmem:[%s1 + $0x38] sm:$0xf]
      %v279 = vld [vmem:[%s1 + $0x3c] sm:$0xf]
      %v280 = vld [vmem:[%s1 + $0x40] sm:$0xf]
      %v281 = vld [vmem:[%s1 + $0x44] sm:$0xf]
      %v282 = vld [vmem:[%s3] sm:$0xf]
      %v283 = vld [vmem:[%s3 + $0x4] sm:$0xf]
      %v284 = vld [vmem:[%s3 + $0x8] sm:$0xf]
      %v285 = vld [vmem:[%s3 + $0xc] sm:$0xf]
      %v286 = vld [vmem:[%s3 + $0x10] sm:$0xf]
      %v287 = vld [vmem:[%s3 + $0x14] sm:$0xf]
      %v288 = vld [vmem:[%s3 + $0x18] sm:$0xf]
      %v289 = vld [vmem:[%s3 + $0x1c] sm:$0xf]
      %v290 = vld [vmem:[%s3 + $0x20] sm:$0xf]
      %v291 = vld [vmem:[%s3 + $0x24] sm:$0xf]
      %v292 = vld [vmem:[%s3 + $0x28] sm:$0xf]
      %v293 = vld [vmem:[%s3 + $0x2c] sm:$0xf]
      %v294 = vld [vmem:[%s3 + $0x30] sm:$0xf]
      %v295 = vld [vmem:[%s3 + $0x34] sm:$0xf]
      %v296 = vld [vmem:[%s3 + $0x38] sm:$0xf]
      %v297 = vld [vmem:[%s3 + $0x3c] sm:$0xf]
      %v298 = vld [vmem:[%s3 + $0x40] sm:$0xf]
      %v299 = vld [vmem:[%s3 + $0x44] sm:$0xf]
      %v300 = vld [vmem:[%s3 + $0x48] sm:$0xf]
      %v301 = vld [vmem:[%s3 + $0x4c] sm:$0xf]
      %v302 = vld [vmem:[%s3 + $0x50] sm:$0xf]
      %v303 = vld [vmem:[%s3 + $0x54] sm:$0xf]
      %v304 = vld [vmem:[%s3 + $0x58] sm:$0xf]
      %v305 = vld [vmem:[%s3 + $0x5c] sm:$0xf]
      %v306 = vld [vmem:[%s3 + $0x60] sm:$0xf]
      %v307 = vld [vmem:[%s3 + $0x64] sm:$0xf]
      %v308 = vld [vmem:[%s3 + $0x68] sm:$0xf]
      %v309 = vld [vmem:[%s3 + $0x6c] sm:$0xf]
      %v310 = vld [vmem:[%s3 + $0x70] sm:$0xf]
      %v311 = vld [vmem:[%s3 + $0x74] sm:$0xf]
      %v312 = vld [vmem:[%s3 + $0x78] sm:$0xf]
      %v313 = vld [vmem:[%s3 + $0x7c] sm:$0xf]
      %v314 = vld [vmem:[%s3 + $0x80] sm:$0xf]
      %v315 = vld [vmem:[%s3 + $0x84] sm:$0xf]
      %v316 = vld [vmem:[%s3 + $0x88] sm:$0xf]
      %v317 = vld [vmem:[%s3 + $0x8c] sm:$0xf]
      %v318 = vld [vmem:[%s2] sm:$0x1]
      %v319 = vld [vmem:[%s4] sm:$0x1]
      %v320 = vld [vmem:[%s253] sm:$0xf]
      %s321 = scalar_lea.vmem %s253, 8
      %v322 = vld [vmem:[%s321] sm:$0xf]
      %s323 = scalar_lea.vmem %s253, 16
      %v324 = vld [vmem:[%s323] sm:$0xf]
      %s325 = scalar_lea.vmem %s253, 32
      %v326 = vld [vmem:[%s325] sm:$0xf]
      %s327 = scalar_lea.vmem %s253, 40
      %v328 = vld [vmem:[%s327] sm:$0xf]
      %s329 = scalar_lea.vmem %s253, 48
      %v330 = vld [vmem:[%s329] sm:$0xf]
      %s331 = scalar_lea.vmem %s253, 64
      %v332 = vld [vmem:[%s331] sm:$0xf]
      %s333 = scalar_lea.vmem %s253, 72
      %v334 = vld [vmem:[%s333] sm:$0xf]
      %s335 = scalar_lea.vmem %s253, 80
      %v336 = vld [vmem:[%s335] sm:$0xf]
      %338 = vrot.lane.b32.xlu0 %v322, 16
      %v339 = vpop.permute.xlu0 %338
      %342 = vrot.lane.b32.xlu0 %v324, 32
      %v343 = vpop.permute.xlu0 %342
      %346 = vrot.lane.b32.xlu0 %v326, 48
      %v347 = vpop.permute.xlu0 %346
      %350 = vrot.lane.b32.xlu0 %v328, 64
      %v351 = vpop.permute.xlu0 %350
      %354 = vrot.lane.b32.xlu0 %v330, 80
      %v355 = vpop.permute.xlu0 %354
      %358 = vrot.lane.b32.xlu0 %v332, 96
      %v359 = vpop.permute.xlu0 %358
      %362 = vrot.lane.b32.xlu0 %v334, 112
      %v363 = vpop.permute.xlu0 %362
      %vm365 = vcmask 130048
      %v366 = vsel %vm365, %v320, %v339
      %vm367 = vcmask 261120
      %v368 = vsel %vm367, %v366, %v343
      %vm369 = vcmask 392192
      %v370 = vsel %vm369, %v368, %v347
      %vm371 = vcmask 523264
      %v372 = vsel %vm371, %v370, %v351
      %vm373 = vcmask 654336
      %v374 = vsel %vm373, %v372, %v355
      %vm375 = vcmask 785408
      %v376 = vsel %vm375, %v374, %v359
      %vm377 = vcmask 916480
      %v378 = vsel %vm377, %v376, %v363
      %v379 = vpack.c.bf16 %v378, %v378
      %v380 = vpack.c.bf16 %v336, %v336
      %v382 = vperm.slane %v318, 0
      %v402 = vunpack.c.l.b16 %v264
      %v403 = vunpack.c.l.b16 %v265
      %v404 = vunpack.c.l.b16 %v266
      %v405 = vunpack.c.l.b16 %v267
      %v406 = vunpack.c.l.b16 %v268
      %v407 = vunpack.c.l.b16 %v269
      %v408 = vunpack.c.l.b16 %v270
      %v409 = vunpack.c.l.b16 %v271
      %v410 = vunpack.c.l.b16 %v272
      %v411 = vunpack.c.l.b16 %v273
      %v412 = vunpack.c.l.b16 %v274
      %v413 = vunpack.c.l.b16 %v275
      %v414 = vunpack.c.l.b16 %v276
      %v415 = vunpack.c.l.b16 %v277
      %v416 = vunpack.c.l.b16 %v278
      %v417 = vunpack.c.l.b16 %v279
      %v418 = vunpack.c.l.b16 %v280
      %v419 = vunpack.c.l.b16 %v281
      %v420 = vpack.c.b16 %v403, %v402
      %v421 = vpack.c.b16 %v405, %v404
      %v422 = vpack.c.b16 %v407, %v406
      %v423 = vpack.c.b16 %v409, %v408
      %v424 = vpack.c.b16 %v411, %v410
      %v425 = vpack.c.b16 %v413, %v412
      %v426 = vpack.c.b16 %v415, %v414
      %v427 = vpack.c.b16 %v417, %v416
      %v428 = vpack.c.b16 %v419, %v418
      %v439 = vsel %vm365, %v380, 0
      %441 = vmatpush.bf16.msra.mxu0 %v427
      %442 = vmatpush.bf16.msra.mxu0 %v426
      %443 = vmatpush.bf16.msra.mxu0 %v425
      %444 = vmatpush.bf16.msra.mxu0 %v424
      %445 = vmatpush.bf16.msra.mxu0 %v423
      %446 = vmatpush.bf16.msra.mxu0 %v422
      %447 = vmatpush.bf16.msra.mxu0 %v421
      %448 = vmatpush.bf16.msra.mxu0 %v420
      %449 = vmatmul.bf16.gmra.mxu0 %v379
      %v450 = vpop.f32.mrf.mxu0
      %v451 = vadd.f32 %v382, %v450
      %v452 = vpop.f32.mrf.mxu0
      %453 = vdwg.mxu0
      %454 = vmatpush.bf16.msra.mxu0 0
      %455 = vmatpush.bf16.msra.mxu0 0
      %456 = vmatpush.bf16.msra.mxu0 0
      %457 = vmatpush.bf16.msra.mxu0 0
      %458 = vmatpush.bf16.msra.mxu0 0
      %459 = vmatpush.bf16.msra.mxu0 0
      %460 = vmatpush.bf16.msra.mxu0 0
      %461 = vmatpush.bf16.msra.mxu0 %v428
      %462 = vmatmul.bf16.gmra.mxu0 %v439
      %v463 = vpop.f32.mrf.mxu0
      %v464 = vadd.f32 %v451, %v463
      %v465 = vpop.f32.mrf.mxu0
      %466 = vdwg.mxu0
      %v467 = vmax.f32 %v464, 0.0
      %vm468 = vcmask 257024
      %469 = vst.msk [vmem:[%s258] sm:$0xf] %vm468, %v467
      %v470 = vpack.c.bf16 %v467, %v467
      %v471 = vld [vmem:[%s323] sm:$0xf]
      %s472 = scalar_lea.vmem %s253, 24
      %v473 = vld [vmem:[%s472] sm:$0xf]
      %v474 = vld [vmem:[%s253] sm:$0xf]
      %v475 = vld [vmem:[%s329] sm:$0xf]
      %s476 = scalar_lea.vmem %s253, 56
      %v477 = vld [vmem:[%s476] sm:$0xf]
      %v478 = vld [vmem:[%s325] sm:$0xf]
      %v479 = vld [vmem:[%s335] sm:$0xf]
      %s480 = scalar_lea.vmem %s253, 88
      %v481 = vld [vmem:[%s480] sm:$0xf]
      %v482 = vld [vmem:[%s331] sm:$0xf]
      %484 = vrot.lane.b32.xlu0 %v473, 16
      %v485 = vpop.permute.xlu0 %484
      %488 = vrot.lane.b32.xlu0 %v474, 28
      %v489 = vpop.permute.xlu0 %488
      %492 = vrot.lane.b32.xlu0 %v475, 48
      %v493 = vpop.permute.xlu0 %492
      %496 = vrot.lane.b32.xlu0 %v477, 64
      %v497 = vpop.permute.xlu0 %496
      %500 = vrot.lane.b32.xlu0 %v478, 76
      %v501 = vpop.permute.xlu0 %500
      %504 = vrot.lane.b32.xlu0 %v479, 96
      %v505 = vpop.permute.xlu0 %504
      %508 = vrot.lane.b32.xlu0 %v481, 112
      %v509 = vpop.permute.xlu0 %508
      %512 = vrot.lane.b32.xlu0 %v482, 124
      %v513 = vpop.permute.xlu0 %512
      %v515 = vsel %vm365, %v471, %v485
      %v516 = vsel %vm367, %v515, %v489
      %v517 = vsel %vm369, %v516, %v493
      %v518 = vsel %vm371, %v517, %v497
      %v519 = vsel %vm373, %v518, %v501
      %v520 = vsel %vm375, %v519, %v505
      %v521 = vsel %vm377, %v520, %v509
      %v522 = vpack.c.bf16 %v521, %v521
      %v523 = vpack.c.bf16 %v513, %v513
      %v525 = vsel %vm365, %v523, 0
      %527 = vmatpush.bf16.msra.mxu0 %v427
      %528 = vmatpush.bf16.msra.mxu0 %v426
      %529 = vmatpush.bf16.msra.mxu0 %v425
      %530 = vmatpush.bf16.msra.mxu0 %v424
      %531 = vmatpush.bf16.msra.mxu0 %v423
      %532 = vmatpush.bf16.msra.mxu0 %v422
      %533 = vmatpush.bf16.msra.mxu0 %v421
      %534 = vmatpush.bf16.msra.mxu0 %v420
      %535 = vmatmul.bf16.gmra.mxu0 %v522
      %v536 = vpop.f32.mrf.mxu0
      %v537 = vadd.f32 %v382, %v536
      %v538 = vpop.f32.mrf.mxu0
      %539 = vdwg.mxu0
      %540 = vmatpush.bf16.msra.mxu0 0
      %541 = vmatpush.bf16.msra.mxu0 0
      %542 = vmatpush.bf16.msra.mxu0 0
      %543 = vmatpush.bf16.msra.mxu0 0
      %544 = vmatpush.bf16.msra.mxu0 0
      %545 = vmatpush.bf16.msra.mxu0 0
      %546 = vmatpush.bf16.msra.mxu0 0
      %547 = vmatpush.bf16.msra.mxu0 %v428
      %548 = vmatmul.bf16.gmra.mxu0 %v525
      %v549 = vpop.f32.mrf.mxu0
      %v550 = vadd.f32 %v537, %v549
      %v551 = vpop.f32.mrf.mxu0
      %552 = vdwg.mxu0
      %v553 = vmax.f32 %v550, 0.0
      %s554 = scalar_lea.vmem %s258, 4
      %555 = vst.msk [vmem:[%s554] sm:$0xf] %vm468, %v553
      %v556 = vpack.c.bf16 %v553, %v553
      %v557 = vld [vmem:[%s331] sm:$0xf]
      %v558 = vld [vmem:[%s333] sm:$0xf]
      %v559 = vld [vmem:[%s335] sm:$0xf]
      %s560 = scalar_lea.vmem %s253, 96
      %v561 = vld [vmem:[%s560] sm:$0xf]
      %s562 = scalar_lea.vmem %s253, 104
      %v563 = vld [vmem:[%s562] sm:$0xf]
      %s564 = scalar_lea.vmem %s253, 112
      %v565 = vld [vmem:[%s564] sm:$0xf]
      %v566 = vld [vmem:[%s253 + $0x1] sm:$0xf]
      %v567 = vld [vmem:[%s321 + $0x1] sm:$0xf]
      %v568 = vld [vmem:[%s323 + $0x1] sm:$0xf]
      %570 = vrot.lane.b32.xlu0 %v558, 16
      %v571 = vpop.permute.xlu0 %570
      %574 = vrot.lane.b32.xlu0 %v559, 32
      %v575 = vpop.permute.xlu0 %574
      %578 = vrot.lane.b32.xlu0 %v561, 48
      %v579 = vpop.permute.xlu0 %578
      %582 = vrot.lane.b32.xlu0 %v563, 64
      %v583 = vpop.permute.xlu0 %582
      %586 = vrot.lane.b32.xlu0 %v565, 80
      %v587 = vpop.permute.xlu0 %586
      %590 = vrot.lane.b32.xlu0 %v566, 96
      %v591 = vpop.permute.xlu0 %590
      %594 = vrot.lane.b32.xlu0 %v567, 112
      %v595 = vpop.permute.xlu0 %594
      %v597 = vsel %vm365, %v557, %v571
      %v598 = vsel %vm367, %v597, %v575
      %v599 = vsel %vm369, %v598, %v579
      %v600 = vsel %vm371, %v599, %v583
      %v601 = vsel %vm373, %v600, %v587
      %v602 = vsel %vm375, %v601, %v591
      %v603 = vsel %vm377, %v602, %v595
      %v604 = vpack.c.bf16 %v603, %v603
      %v605 = vpack.c.bf16 %v568, %v568
      %v607 = vsel %vm365, %v605, 0
      %609 = vmatpush.bf16.msra.mxu0 %v427
      %610 = vmatpush.bf16.msra.mxu0 %v426
      %611 = vmatpush.bf16.msra.mxu0 %v425
      %612 = vmatpush.bf16.msra.mxu0 %v424
      %613 = vmatpush.bf16.msra.mxu0 %v423
      %614 = vmatpush.bf16.msra.mxu0 %v422
      %615 = vmatpush.bf16.msra.mxu0 %v421
      %616 = vmatpush.bf16.msra.mxu0 %v420
      %617 = vmatmul.bf16.gmra.mxu0 %v604
      %v618 = vpop.f32.mrf.mxu0
      %v619 = vadd.f32 %v382, %v618
      %v620 = vpop.f32.mrf.mxu0
      %621 = vdwg.mxu0
      %622 = vmatpush.bf16.msra.mxu0 0
      %623 = vmatpush.bf16.msra.mxu0 0
      %624 = vmatpush.bf16.msra.mxu0 0
      %625 = vmatpush.bf16.msra.mxu0 0
      %626 = vmatpush.bf16.msra.mxu0 0
      %627 = vmatpush.bf16.msra.mxu0 0
      %628 = vmatpush.bf16.msra.mxu0 0
      %629 = vmatpush.bf16.msra.mxu0 %v428
      %630 = vmatmul.bf16.gmra.mxu0 %v607
      %v631 = vpop.f32.mrf.mxu0
      %v632 = vadd.f32 %v619, %v631
      %v633 = vpop.f32.mrf.mxu0
      %634 = vdwg.mxu0
      %v635 = vmax.f32 %v632, 0.0
      %s636 = scalar_lea.vmem %s258, 8
      %637 = vst.msk [vmem:[%s636] sm:$0xf] %vm468, %v635
      %v638 = vpack.c.bf16 %v635, %v635
      %v639 = vld [vmem:[%s335] sm:$0xf]
      %v640 = vld [vmem:[%s480] sm:$0xf]
      %v641 = vld [vmem:[%s331] sm:$0xf]
      %v642 = vld [vmem:[%s564] sm:$0xf]
      %s643 = scalar_lea.vmem %s253, 120
      %v644 = vld [vmem:[%s643] sm:$0xf]
      %v645 = vld [vmem:[%s560] sm:$0xf]
      %v646 = vld [vmem:[%s323 + $0x1] sm:$0xf]
      %v647 = vld [vmem:[%s472 + $0x1] sm:$0xf]
      %v648 = vld [vmem:[%s253 + $0x1] sm:$0xf]
      %650 = vrot.lane.b32.xlu0 %v640, 16
      %v651 = vpop.permute.xlu0 %650
      %654 = vrot.lane.b32.xlu0 %v641, 28
      %v655 = vpop.permute.xlu0 %654
      %658 = vrot.lane.b32.xlu0 %v642, 48
      %v659 = vpop.permute.xlu0 %658
      %662 = vrot.lane.b32.xlu0 %v644, 64
      %v663 = vpop.permute.xlu0 %662
      %666 = vrot.lane.b32.xlu0 %v645, 76
      %v667 = vpop.permute.xlu0 %666
      %670 = vrot.lane.b32.xlu0 %v646, 96
      %v671 = vpop.permute.xlu0 %670
      %674 = vrot.lane.b32.xlu0 %v647, 112
      %v675 = vpop.permute.xlu0 %674
      %678 = vrot.lane.b32.xlu0 %v648, 124
      %v679 = vpop.permute.xlu0 %678
      %v681 = vsel %vm365, %v639, %v651
      %v682 = vsel %vm367, %v681, %v655
      %v683 = vsel %vm369, %v682, %v659
      %v684 = vsel %vm371, %v683, %v663
      %v685 = vsel %vm373, %v684, %v667
      %v686 = vsel %vm375, %v685, %v671
      %v687 = vsel %vm377, %v686, %v675
      %v688 = vpack.c.bf16 %v687, %v687
      %v689 = vpack.c.bf16 %v679, %v679
      %v691 = vsel %vm365, %v689, 0
      %693 = vmatpush.bf16.msra.mxu0 %v427
      %694 = vmatpush.bf16.msra.mxu0 %v426
      %695 = vmatpush.bf16.msra.mxu0 %v425
      %696 = vmatpush.bf16.msra.mxu0 %v424
      %697 = vmatpush.bf16.msra.mxu0 %v423
      %698 = vmatpush.bf16.msra.mxu0 %v422
      %699 = vmatpush.bf16.msra.mxu0 %v421
      %700 = vmatpush.bf16.msra.mxu0 %v420
      %701 = vmatmul.bf16.gmra.mxu0 %v688
      %v702 = vpop.f32.mrf.mxu0
      %v703 = vadd.f32 %v382, %v702
      %v704 = vpop.f32.mrf.mxu0
      %705 = vdwg.mxu0
      %706 = vmatpush.bf16.msra.mxu0 0
      %707 = vmatpush.bf16.msra.mxu0 0
      %708 = vmatpush.bf16.msra.mxu0 0
      %709 = vmatpush.bf16.msra.mxu0 0
      %710 = vmatpush.bf16.msra.mxu0 0
      %711 = vmatpush.bf16.msra.mxu0 0
      %712 = vmatpush.bf16.msra.mxu0 0
      %713 = vmatpush.bf16.msra.mxu0 %v428
      %714 = vmatmul.bf16.gmra.mxu0 %v691
      %v715 = vpop.f32.mrf.mxu0
      %v716 = vadd.f32 %v703, %v715
      %v717 = vpop.f32.mrf.mxu0
      %718 = vdwg.mxu0
      %v719 = vmax.f32 %v716, 0.0
      %s720 = scalar_lea.vmem %s258, 12
      %721 = vst.msk [vmem:[%s720] sm:$0xf] %vm468, %v719
      %v722 = vpack.c.bf16 %v719, %v719
      %v724 = vunpack.c.l.b16 %v722
      %v725 = vpack.c.b16 %v724, %v724
      %v727 = vshrl.u32 %v725, 16
      %v729 = vrot.slane %v727, 7
      %v730 = vshll.u32 %v725, 16
      %v732 = vor.u32 %v729, %v730
      %vm734 = vcmask 1040384
      %vm735 = vsmask.f32 256
      %vm736 = vmand %vm734, %vm735
      %v737 = vsel %vm736, 0, %v732
      %739 = vrot.lane.b32.xlu0 %v737, 8
      %v740 = vpop.permute.xlu0 %739
      %vm741 = vcmask 64512
      %v744 = vsel %vm741, 0, %v740
      %v746 = vunpack.c.l.b16 %v638
      %v747 = vpack.c.b16 %v746, %v746
      %v749 = vshrl.u32 %v747, 16
      %v751 = vrot.slane %v749, 7
      %v752 = vshll.u32 %v747, 16
      %v754 = vor.u32 %v751, %v752
      %v756 = vsel %vm736, 0, %v754
      %v758 = vunpack.c.l.b16 %v556
      %v759 = vpack.c.b16 %v758, %v758
      %760 = vrot.lane.b32.xlu0 %v759, 8
      %v761 = vpop.permute.xlu0 %760
      %v763 = vsel %vm741, 0, %v761
      %764 = vrot.lane.b32.xlu0 %v725, 8
      %v765 = vpop.permute.xlu0 %764
      %v767 = vsel %vm741, 0, %v765
      %769 = vrot.lane.b32.xlu0 %v756, 32
      %v770 = vpop.permute.xlu0 %769
      %771 = vrot.lane.b32.xlu0 %v737, 64
      %v772 = vpop.permute.xlu0 %771
      %774 = vrot.lane.b32.xlu0 %v763, 96
      %v775 = vpop.permute.xlu0 %774
      %776 = vrot.lane.b32.xlu0 %v759, 32
      %v777 = vpop.permute.xlu0 %776
      %779 = vrot.lane.b32.xlu0 %v767, 64
      %v780 = vpop.permute.xlu0 %779
      %781 = vrot.lane.b32.xlu0 %v747, 96
      %v782 = vpop.permute.xlu0 %781
      %v784 = vsel %vm367, %v744, %v770
      %v786 = vsel %vm371, %v784, %v772
      %v788 = vsel %vm375, %v786, %v775
      %v792 = vsel %vm367, %v470, %v777
      %v794 = vsel %vm371, %v792, %v780
      %v796 = vsel %vm375, %v794, %v782
      %v799 = vperm.slane %v319, 0
      %v837 = vunpack.c.l.b16 %v282
      %v838 = vunpack.c.l.b16 %v283
      %v839 = vunpack.c.l.b16 %v284
      %v840 = vunpack.c.l.b16 %v285
      %v841 = vunpack.c.l.b16 %v286
      %v842 = vunpack.c.l.b16 %v287
      %v843 = vunpack.c.l.b16 %v288
      %v844 = vunpack.c.l.b16 %v289
      %v845 = vunpack.c.l.b16 %v290
      %v846 = vunpack.c.l.b16 %v291
      %v847 = vunpack.c.l.b16 %v292
      %v848 = vunpack.c.l.b16 %v293
      %v849 = vunpack.c.l.b16 %v294
      %v850 = vunpack.c.l.b16 %v295
      %v851 = vunpack.c.l.b16 %v296
      %v852 = vunpack.c.l.b16 %v297
      %v853 = vunpack.c.l.b16 %v298
      %v854 = vunpack.c.l.b16 %v299
      %v855 = vunpack.c.l.b16 %v300
      %v856 = vunpack.c.l.b16 %v301
      %v857 = vunpack.c.l.b16 %v302
      %v858 = vunpack.c.l.b16 %v303
      %v859 = vunpack.c.l.b16 %v304
      %v860 = vunpack.c.l.b16 %v305
      %v861 = vunpack.c.l.b16 %v306
      %v862 = vunpack.c.l.b16 %v307
      %v863 = vunpack.c.l.b16 %v308
      %v864 = vunpack.c.l.b16 %v309
      %v865 = vunpack.c.l.b16 %v310
      %v866 = vunpack.c.l.b16 %v311
      %v867 = vunpack.c.l.b16 %v312
      %v868 = vunpack.c.l.b16 %v313
      %v869 = vunpack.c.l.b16 %v314
      %v870 = vunpack.c.l.b16 %v315
      %v871 = vunpack.c.l.b16 %v316
      %v872 = vunpack.c.l.b16 %v317
      %v873 = vpack.c.b16 %v838, %v837
      %v874 = vpack.c.b16 %v840, %v839
      %v875 = vpack.c.b16 %v842, %v841
      %v876 = vpack.c.b16 %v844, %v843
      %v877 = vpack.c.b16 %v846, %v845
      %v878 = vpack.c.b16 %v848, %v847
      %v879 = vpack.c.b16 %v850, %v849
      %v880 = vpack.c.b16 %v852, %v851
      %v881 = vpack.c.b16 %v854, %v853
      %v882 = vpack.c.b16 %v856, %v855
      %v883 = vpack.c.b16 %v858, %v857
      %v884 = vpack.c.b16 %v860, %v859
      %v885 = vpack.c.b16 %v862, %v861
      %v886 = vpack.c.b16 %v864, %v863
      %v887 = vpack.c.b16 %v866, %v865
      %v888 = vpack.c.b16 %v868, %v867
      %v889 = vpack.c.b16 %v870, %v869
      %v890 = vpack.c.b16 %v872, %v871
      %v910 = vsel %vm367, %v722, 0
      %912 = vmatpush.bf16.msra.mxu0 %v880
      %913 = vmatpush.bf16.msra.mxu0 %v879
      %914 = vmatpush.bf16.msra.mxu0 %v878
      %915 = vmatpush.bf16.msra.mxu0 %v877
      %916 = vmatpush.bf16.msra.mxu0 %v876
      %917 = vmatpush.bf16.msra.mxu0 %v875
      %918 = vmatpush.bf16.msra.mxu0 %v874
      %919 = vmatpush.bf16.msra.mxu0 %v873
      %920 = vmatmul.bf16.gmra.mxu0 %v788
      %v921 = vpop.f32.mrf.mxu0
      %v922 = vadd.f32 %v799, %v921
      %v923 = vpop.f32.mrf.mxu0
      %924 = vdwg.mxu0
      %925 = vmatpush.bf16.msra.mxu0 %v888
      %926 = vmatpush.bf16.msra.mxu0 %v887
      %927 = vmatpush.bf16.msra.mxu0 %v886
      %928 = vmatpush.bf16.msra.mxu0 %v885
      %929 = vmatpush.bf16.msra.mxu0 %v884
      %930 = vmatpush.bf16.msra.mxu0 %v883
      %931 = vmatpush.bf16.msra.mxu0 %v882
      %932 = vmatpush.bf16.msra.mxu0 %v881
      %933 = vmatmul.bf16.gmra.mxu0 %v796
      %v934 = vpop.f32.mrf.mxu0
      %v935 = vadd.f32 %v922, %v934
      %v936 = vpop.f32.mrf.mxu0
      %937 = vdwg.mxu0
      %938 = vmatpush.bf16.msra.mxu0 0
      %939 = vmatpush.bf16.msra.mxu0 0
      %940 = vmatpush.bf16.msra.mxu0 0
      %941 = vmatpush.bf16.msra.mxu0 0
      %942 = vmatpush.bf16.msra.mxu0 0
      %943 = vmatpush.bf16.msra.mxu0 0
      %944 = vmatpush.bf16.msra.mxu0 %v890
      %945 = vmatpush.bf16.msra.mxu0 %v889
      %946 = vmatmul.bf16.gmra.mxu0 %v910
      %v947 = vpop.f32.mrf.mxu0
      %v948 = vadd.f32 %v935, %v947
      %v949 = vpop.f32.mrf.mxu0
      %950 = vdwg.mxu0
      %v951 = vmax.f32 %v948, 0.0
      %vm952 = vcmask 519168
      %953 = vst.msk [vmem:[%s262] sm:$0xf] %vm952, %v951
      %p954 = scmp.lt.s32.totalorder %s18, 1
      %s955 = scalar_select %p954, %s18, 1
      %s956 = smul.addr %s955, 4
      %s957 = smul.addr %s956, 4
      %s958 = scalar_lea.vmem %s5, %s957
      %p959 = scmp.lt.s32.totalorder %s18, 1
      %s960 = scalar_select %p959, %s18, 1
      %s961 = smul.addr %s960, 4
      %s962 = scalar_lea.vmem %s6, %s961
      // Predicated region
      $region41: #{_fused_forward.1} parent=39 // pred_check
        %p963 = pneg %p146
      $region42: #{_fused_forward.1} parent=39 // pred_check_branch
        %965 = sbr.rel (%p963) target = $region44
      $region43: #{_fused_forward.1} parent=39 // pred_region
        _
      $region44: #{_fused_forward.1} parent=39 // pred_fallthru
        _
      // Predicated region
      $region45: #{_fused_forward.1} parent=39 // pred_check
        %p966 = pneg %p172
      $region46: #{_fused_forward.1} parent=39 // pred_check_branch
        %968 = sbr.rel (%p966) target = $region48
      $region47: #{_fused_forward.1} parent=39 // pred_region
        _
      $region48: #{_fused_forward.1} parent=39 // pred_fallthru
        _
    $region40: #{_fused_forward.1} parent=5 // pred_fallthru
      _
    %p969 = scmp.le.s32.totalorder 2, %s13
    // Predicated region
    $region49: #{_fused_forward.1} parent=5 // pred_check
      %p970 = pneg %p969
    $region50: #{_fused_forward.1} parent=5 // pred_check_branch
      %972 = sbr.rel (%p970) target = $region52
    $region51: #{_fused_forward.1} parent=5 // pred_region
      %s973 = ssub.s32 %s13, 2
      // Predicated region
      $region53: #{_fused_forward.1} parent=51 // pred_check
        %p974 = pneg %p152
      $region54: #{_fused_forward.1} parent=51 // pred_check_branch
        %976 = sbr.rel (%p974) target = $region56
      $region55: #{_fused_forward.1} parent=51 // pred_region
        %p977 = scmp.lt.s32.totalorder %s19, 1
        %s978 = scalar_select %p977, %s19, 1
        %s979 = smul.addr %s978, 4
        %s980 = smul.addr %s979, 4
        %s981 = scalar_lea.vmem %s5, %s980
      $region56: #{_fused_forward.1} parent=51 // pred_fallthru
        _
      // Predicated region
      $region57: #{_fused_forward.1} parent=51 // pred_check
        %p982 = pneg %p178
      $region58: #{_fused_forward.1} parent=51 // pred_check_branch
        %984 = sbr.rel (%p982) target = $region60
      $region59: #{_fused_forward.1} parent=51 // pred_region
        %p985 = scmp.lt.s32.totalorder %s19, 1
        %s986 = scalar_select %p985, %s19, 1
        %s987 = smul.addr %s986, 4
        %s988 = scalar_lea.vmem %s6, %s987
      $region60: #{_fused_forward.1} parent=51 // pred_fallthru
        _
    $region52: #{_fused_forward.1} parent=5 // pred_fallthru
      _
  $region6: #{_fused_forward.1} parent=0 // loop_footer
    %s17 = sadd.s32 1, %s13
  $region7: #{_fused_forward.1} parent=0 // loop_footer_branch
    %12 = sbr.rel target = $region3
  $region8: #{_fused_forward.1} parent=0 // loop_exit
    _

</llo_original>
